<compile_context>
chip_gen: v6e
topology: v6e:2x2x1
jax: 0.10.0
libtpu: 0.0.40
codegen_flags: <defaults>
</compile_context>

<pallas_src>
import functools
import math

import numpy as np

import jax
import jax.numpy as jnp
from jax.experimental import pallas as pl
from jax.experimental.pallas import tpu as pltpu

K = 5            # transposed-conv kernel size
OUTPAD = 1
STRIDE = 2
CIN, CMID, COUT = 2, 16, 2
GROUP = 4                    # images stacked on sublanes (GROUP*CIN == 8)
SUB = GROUP * CIN            # 8 dense sublanes per tap block


def _upscaler_kernel(x_ref, w1_ref, w2_ref, b2_ref, o_ref, *, wp):
    """One grid step: GROUP images on sublanes x glane image-groups on lanes.

    x_ref : (8, LW)    4 images x 2 channels on sublanes; flattened padded
                       spatial (lane-padded to 128) x glane groups on lanes
    w1_ref: (256, 80)  block-diagonal phase-stacked transposed-conv weights,
                       b1 fused into column 72 (cols 73..79 zero)
    w2_ref: (32, 256)  block-diagonal 1x1-conv weights
    b2_ref: (32, 1)
    o_ref : (32, LW)   4 images x 4 phases x COUT, lane-dense
    """
    x = x_ref[...]
    lw = x.shape[1]
    # 9 polyphase taps: shifted[:, p] = x[:, p + off].  Lane wrap across
    # segment boundaries / block ends only hits lanes that the wrapper crops
    # (halo rows/cols or lane padding) since |off| <= Wp + 1.
    taps = []
    for dy in (-1, 0, 1):
        for dx in (-1, 0, 1):
            off = dy * wp + dx
            if off == 0:
                taps.append(x)
            else:
                taps.append(pltpu.roll(x, shift=(-off) % lw, axis=1))
    # 8-row ones block: b1 rides the contraction through column 72 of w1.
    taps.append(jnp.ones_like(x))
    s = jnp.concatenate(taps, axis=0)                          # (80, LW)
    mid = jnp.tanh(jnp.dot(w1_ref[...], s,
                           preferred_element_type=jnp.float32))  # (256, LW)
    out = jnp.dot(w2_ref[...], mid,
                  preferred_element_type=jnp.float32) + b2_ref[...]
    o_ref[...] = out.astype(o_ref.dtype)                       # (32, LW)


def _fuse_weights(w_t, b1, w_1x1, b2):
    """Phase- and group-fused weights.

    Per-image polyphase weight (verified layout):
      w1small[(py*2+px)*CMID + o, ((dy+1)*3+(dx+1))*CIN + i]
          = w_t[i, o, 2 + py - 2*dy, 2 + px - 2*dx]   (0 if tap unused)
    Then block-diagonal over the GROUP sublane-stacked images, with b1 folded
    into an extra bias column, and the 1x1 conv block-diagonal over phases and
    images so each grid step is exactly two matmuls.
    """
    pyv = np.array([0, 0, 1, 1]).reshape(4, 1, 1, 1, 1)
    pxv = np.array([0, 1, 0, 1]).reshape(4, 1, 1, 1, 1)
    dyv = np.arange(-1, 2).reshape(1, 1, 3, 1, 1)
    dxv = np.arange(-1, 2).reshape(1, 1, 1, 3, 1)
    ov = np.arange(CMID).reshape(1, CMID, 1, 1, 1)
    iv = np.arange(CIN).reshape(1, 1, 1, 1, CIN)
    ky = (K // 2) + pyv - 2 * dyv
    kx = (K // 2) + pxv - 2 * dxv
    valid = (ky >= 0) & (ky < K) & (kx >= 0) & (kx < K)
    shape = (4, CMID, 3, 3, CIN)
    idx_i = np.broadcast_to(iv, shape)
    idx_o = np.broadcast_to(ov, shape)
    idx_ky = np.broadcast_to(np.clip(ky, 0, K - 1), shape)
    idx_kx = np.broadcast_to(np.clip(kx, 0, K - 1), shape)
    w1small = w_t[idx_i, idx_o, idx_ky, idx_kx] * jnp.asarray(valid, w_t.dtype)
    w1small = w1small.reshape(4 * CMID, 9, CIN)                # (64, 9, 2)

    eye_g = jnp.eye(GROUP, dtype=w_t.dtype)
    # w1core[j*64 + po, t*8 + k*2 + i] = w1small[po, t, i] * (j == k)
    w1core = jnp.einsum("jk,pti->jptki", eye_g, w1small)
    w1core = w1core.reshape(GROUP * 4 * CMID, 9 * SUB)         # (256, 72)
    b1col = jnp.tile(jnp.tile(b1, 4), GROUP).reshape(GROUP * 4 * CMID, 1)
    w1big = jnp.concatenate(
        [w1core, b1col,
         jnp.zeros((GROUP * 4 * CMID, SUB - 1), w_t.dtype)], axis=1)  # (256, 80)

    w2 = w_1x1[:, :, 0, 0]                                     # (COUT, CMID)
    eye4 = jnp.eye(4, dtype=w2.dtype)
    w2phase = jnp.einsum("pq,om->poqm", eye4, w2).reshape(4 * COUT, 4 * CMID)
    w2big = jnp.einsum("jk,pm->jpkm", eye_g, w2phase)
    w2big = w2big.reshape(GROUP * 4 * COUT, GROUP * 4 * CMID)  # (32, 256)
    b2big = jnp.tile(b2, 4 * GROUP).reshape(GROUP * 4 * COUT, 1)  # (32, 1)
    return w1big, w2big, b2big


def _pick_lane_groups(n_groups, l128):
    """Lane-concatenated image-groups per grid step.

    Generation-aware: keep >= 2 grid steps on v7x (2 TensorCores, grid axis is
    'parallel'); fatten steps on single-TC v5e/v6e to amortize the ~0.35us
    per-step overhead.  VMEM-aware: stay well under the default scoped VMEM
    (v5e 16 MiB, v6e/v7x 32 MiB) counting double-buffered in/out blocks, the
    tap matrix and the mid intermediate.
    """
    per_group = (2 * SUB + 9 * SUB + SUB + GROUP * 4 * CMID
                 + 2 * GROUP * 4 * COUT) * l128 * 4           # fp32 bytes
    vmem_cap = max(1, (12 << 20) // per_group)
    try:
        kind = jax.devices()[0].device_kind.lower()
    except Exception:
        kind = ""
    if ("v7" in kind) or ("7x" in kind):          # 2 TensorCores per chip
        step_cap = max(1, -(-n_groups // 2))
    else:                                         # single TC: fatter steps win
        step_cap = min(max(n_groups, 1), 8)
    return max(1, min(vmem_cap, step_cap))


def upscaler_forward(x_nchw, params, lane_groups=None):
    """params = (w_t, b1, w_1x1, b2) in PyTorch layouts:
       w_t   : (CIN, CMID, K, K)   ConvTranspose2d weight
       b1    : (CMID,)
       w_1x1 : (COUT, CMID, 1, 1)  Conv2d weight
       b2    : (COUT,)
    Input x is NCHW; returns NCHW with spatial dims doubled.
    """
    w_t, b1, w_1x1, b2 = params
    N, Cin, H, W = x_nchw.shape
    assert Cin == CIN
    Hp, Wp = H + 2, W + 2
    L = Hp * Wp
    L128 = ((L + 127) // 128) * 128                 # lane-dense segment length

    # --- layout glue (plain XLA): 1-pixel zero halo, flatten, lane-pad ------
    xpad = jnp.pad(x_nchw, ((0, 0), (0, 0), (1, 1), (1, 1)))
    xflat = jnp.pad(xpad.reshape(N, CIN, L), ((0, 0), (0, 0), (0, L128 - L)))

    # --- pad batch to a multiple of GROUP; stack 4 images on sublanes -------
    n_groups = -(-N // GROUP)
    n_pad = n_groups * GROUP - N
    if n_pad:
        xflat = jnp.pad(xflat, ((0, n_pad), (0, 0), (0, 0)))
    x_grp = xflat.reshape(n_groups, SUB, L128)      # (g, 8, L128)

    # --- lane-concatenate glane groups per grid step -------------------------
    glane = (lane_groups if lane_groups is not None
             else _pick_lane_groups(n_groups, L128))
    n_steps = -(-n_groups // glane)
    g_pad = n_steps * glane - n_groups
    if g_pad:
        x_grp = jnp.pad(x_grp, ((0, g_pad), (0, 0), (0, 0)))
    LW = glane * L128
    x_in = (x_grp.reshape(n_steps, glane, SUB, L128)
                 .transpose(0, 2, 1, 3)
                 .reshape(n_steps * SUB, LW))

    w1big, w2big, b2big = _fuse_weights(w_t, b1, w_1x1, b2)

    flops = 2 * n_steps * LW * (w1big.shape[0] * w1big.shape[1]
                                + w2big.shape[0] * w2big.shape[1])
    bytes_accessed = 4 * (x_in.size + n_steps * GROUP * 4 * COUT * LW
                          + w1big.size + w2big.size + b2big.size)
    cost = pl.CostEstimate(flops=int(flops),
                           transcendentals=int(n_steps * GROUP * 4 * CMID * LW),
                           bytes_accessed=int(bytes_accessed))

    out_flat = pl.pallas_call(
        functools.partial(_upscaler_kernel, wp=Wp),
        out_shape=jax.ShapeDtypeStruct((n_steps * GROUP * 4 * COUT, LW),
                                       x_nchw.dtype),
        grid_spec=pltpu.PrefetchScalarGridSpec(
            num_scalar_prefetch=0,
            grid=(n_steps,),
            in_specs=[
                pl.BlockSpec((SUB, LW), lambda g: (g, 0)),
                pl.BlockSpec(w1big.shape, lambda g: (0, 0)),
                pl.BlockSpec(w2big.shape, lambda g: (0, 0)),
                pl.BlockSpec(b2big.shape, lambda g: (0, 0)),
            ],
            out_specs=pl.BlockSpec((GROUP * 4 * COUT, LW), lambda g: (g, 0)),
        ),
        compiler_params=pltpu.CompilerParams(
            dimension_semantics=("parallel",)),
        cost_estimate=cost,
    )(x_in, w1big, w2big, b2big)

    # --- unpack: undo lane grouping, pixel-shuffle the phases, crop halo ----
    out_g = (out_flat.reshape(n_steps, GROUP * 4 * COUT, glane, L128)
                     .transpose(0, 2, 1, 3)
                     .reshape(n_steps * glane, GROUP * 4 * COUT, L128))
    out_g = out_g[:n_groups]
    out_k = out_g.reshape(n_groups, GROUP, 2, 2, COUT, L128)[..., :L]
    out_k = out_k.reshape(n_groups * GROUP, 2, 2, COUT, Hp, Wp)[:N]
    out_k = out_k[:, :, :, :, 1:H + 1, 1:W + 1]     # crop the 1-pixel halo
    out = jnp.transpose(out_k, (0, 3, 4, 1, 5, 2)).reshape(N, COUT, 2 * H, 2 * W)
    return out


def reference_forward(x_nchw, params):
    """Pure-JAX reference (lax convs) matching nn.ConvTranspose2d semantics."""
    w_t, b1, w_1x1, b2 = params
    w_conv = jnp.transpose(jnp.flip(w_t, (2, 3)), (1, 0, 2, 3))   # OIHW
    pad = K // 2
    y = jax.lax.conv_general_dilated(
        x_nchw, w_conv, window_strides=(1, 1),
        padding=[(K - 1 - pad, K - 1 - pad + OUTPAD)] * 2,
        lhs_dilation=(STRIDE, STRIDE),
        dimension_numbers=("NCHW", "OIHW", "NCHW"))
    y = y + b1.reshape(1, -1, 1, 1)
    t = jnp.tanh(y)
    out = jax.lax.conv_general_dilated(
        t, w_1x1, window_strides=(1, 1), padding=[(0, 0), (0, 0)],
        dimension_numbers=("NCHW", "OIHW", "NCHW"))
    return out + b2.reshape(1, -1, 1, 1)


def init_params(key):
    """Deterministic init mirroring the module's parameter shapes."""
    k1, k2, k3, k4 = jax.random.split(key, 4)
    bound1 = 1.0 / math.sqrt(CIN * K * K)
    w_t = jax.random.uniform(k1, (CIN, CMID, K, K), jnp.float32, -bound1, bound1)
    b1 = jax.random.uniform(k2, (CMID,), jnp.float32, -bound1, bound1)
    bound2 = 1.0 / math.sqrt(CMID)
    w_1x1 = jax.random.uniform(k3, (COUT, CMID, 1, 1), jnp.float32, -bound2, bound2)
    b2 = jax.random.uniform(k4, (COUT,), jnp.float32, -bound2, bound2)
    return w_t, b1, w_1x1, b2


if __name__ == "__main__":
    root = jax.random.PRNGKey(0)
    kx, kp = jax.random.split(root)
    params = init_params(kp)

    # (N, 2, H, W) -> (N, 2, 2H, 2W)
    x = jax.random.normal(kx, (2, 2, 16, 16), jnp.float32)

    out = jax.block_until_ready(upscaler_forward(x, params))
    ref = jax.block_until_ready(reference_forward(x, params))

    assert out.shape == (2, 2, 32, 32), out.shape
    err = float(jnp.max(jnp.abs(out - ref)))
    assert jnp.allclose(out, ref, atol=1e-4, rtol=1e-4), err

    print("KERNEL_OK")
</pallas_src>

<mosaic_0001>
module attributes {stable_mosaic.version = 11 : i64} {
  func.func @_upscaler_kernel(%arg0: i32, %arg1: memref<8x384xf32, #tpu.memory_space<vmem>>, %arg2: memref<256x80xf32, #tpu.memory_space<vmem>>, %arg3: memref<32x256xf32, #tpu.memory_space<vmem>>, %arg4: memref<32x1xf32, #tpu.memory_space<vmem>>, %arg5: memref<32x384xf32, #tpu.memory_space<vmem>>) attributes {dimension_semantics = [#tpu.dimension_semantics<parallel>], iteration_bounds = array<i64: 1>, scalar_prefetch = 0 : i64, scratch_operands = 0 : i64, tpu.core_type = #tpu.core_type<tc>, window_params = [{transform_indices = @transform_0, window_bounds = array<i64: 8, 384>}, {pipeline_mode = #tpu.pipeline_mode<synchronous>, transform_indices = @transform_1, window_bounds = array<i64: 256, 80>}, {pipeline_mode = #tpu.pipeline_mode<synchronous>, transform_indices = @transform_2, window_bounds = array<i64: 32, 256>}, {pipeline_mode = #tpu.pipeline_mode<synchronous>, transform_indices = @transform_3, window_bounds = array<i64: 32, 1>}, {transform_indices = @transform_4, window_bounds = array<i64: 32, 384>}]} {
    %c0 = arith.constant 0 : index
    %c0_0 = arith.constant 0 : index
    %0 = vector.load %arg1[%c0, %c0_0] : memref<8x384xf32, #tpu.memory_space<vmem>>, vector<8x384xf32>
    %c19_i32 = arith.constant 19 : i32
    %1 = tpu.dynamic_rotate %0 by %c19_i32 dim 1 : vector<8x384xf32>, i32 -> vector<8x384xf32>
    %c18_i32 = arith.constant 18 : i32
    %2 = tpu.dynamic_rotate %0 by %c18_i32 dim 1 : vector<8x384xf32>, i32 -> vector<8x384xf32>
    %c17_i32 = arith.constant 17 : i32
    %3 = tpu.dynamic_rotate %0 by %c17_i32 dim 1 : vector<8x384xf32>, i32 -> vector<8x384xf32>
    %c1_i32 = arith.constant 1 : i32
    %4 = tpu.dynamic_rotate %0 by %c1_i32 dim 1 : vector<8x384xf32>, i32 -> vector<8x384xf32>
    %c383_i32 = arith.constant 383 : i32
    %5 = tpu.dynamic_rotate %0 by %c383_i32 dim 1 : vector<8x384xf32>, i32 -> vector<8x384xf32>
    %c367_i32 = arith.constant 367 : i32
    %6 = tpu.dynamic_rotate %0 by %c367_i32 dim 1 : vector<8x384xf32>, i32 -> vector<8x384xf32>
    %c366_i32 = arith.constant 366 : i32
    %7 = tpu.dynamic_rotate %0 by %c366_i32 dim 1 : vector<8x384xf32>, i32 -> vector<8x384xf32>
    %c365_i32 = arith.constant 365 : i32
    %8 = tpu.dynamic_rotate %0 by %c365_i32 dim 1 : vector<8x384xf32>, i32 -> vector<8x384xf32>
    %cst = arith.constant 1.000000e+00 : f32
    %9 = vector.broadcast %cst : f32 to vector<8x384xf32>
    %10 = tpu.concatenate %1, %2, %3, %4, %0, %5, %6, %7, %8, %9 in 0 : vector<8x384xf32>, vector<8x384xf32>, vector<8x384xf32>, vector<8x384xf32>, vector<8x384xf32>, vector<8x384xf32>, vector<8x384xf32>, vector<8x384xf32>, vector<8x384xf32>, vector<8x384xf32> -> vector<80x384xf32>
    %c0_1 = arith.constant 0 : index
    %c0_2 = arith.constant 0 : index
    %11 = vector.load %arg2[%c0_1, %c0_2] : memref<256x80xf32, #tpu.memory_space<vmem>>, vector<256x80xf32>
    %cst_3 = arith.constant dense<0.000000e+00> : vector<256x384xf32>
    %12 = tpu.matmul %11, %10, %cst_3 {dimension_numbers = #tpu.dot_dimension_numbers<[1], [0], [0], [1], [0, 0, 1, 1], [], []>} : vector<256x80xf32>, vector<80x384xf32>, vector<256x384xf32> -> vector<256x384xf32>
    %13 = math.tanh %12 : vector<256x384xf32>
    %c0_4 = arith.constant 0 : index
    %c0_5 = arith.constant 0 : index
    %14 = vector.load %arg3[%c0_4, %c0_5] : memref<32x256xf32, #tpu.memory_space<vmem>>, vector<32x256xf32>
    %cst_6 = arith.constant dense<0.000000e+00> : vector<32x384xf32>
    %15 = tpu.matmul %14, %13, %cst_6 {dimension_numbers = #tpu.dot_dimension_numbers<[1], [0], [0], [1], [0, 0, 1, 1], [], []>} : vector<32x256xf32>, vector<256x384xf32>, vector<32x384xf32> -> vector<32x384xf32>
    %c0_7 = arith.constant 0 : index
    %c0_8 = arith.constant 0 : index
    %16 = vector.load %arg4[%c0_7, %c0_8] : memref<32x1xf32, #tpu.memory_space<vmem>>, vector<32x1xf32>
    %17 = vector.broadcast %16 : vector<32x1xf32> to vector<32x384xf32>
    %18 = arith.addf %15, %17 : vector<32x384xf32>
    %c0_9 = arith.constant 0 : index
    %c0_10 = arith.constant 0 : index
    %19 = vector.load %arg5[%c0_9, %c0_10] : memref<32x384xf32, #tpu.memory_space<vmem>>, vector<32x384xf32>
    tpu.vector_store %arg5[%c0_9, %c0_10], %18 {strides = array<i32>} : memref<32x384xf32, #tpu.memory_space<vmem>>, vector<32x384xf32>,
    return
  }
  func.func @transform_0(%arg0: i32) -> (i32, i32) {
    %c0_i32 = arith.constant 0 : i32
    %c0_i32_0 = arith.constant 0 : i32
    return %arg0, %c0_i32 : i32, i32
  }
  func.func @transform_1(%arg0: i32) -> (i32, i32) {
    %c0_i32 = arith.constant 0 : i32
    %c0_i32_0 = arith.constant 0 : i32
    %c0_i32_1 = arith.constant 0 : i32
    return %c0_i32, %c0_i32_0 : i32, i32
  }
  func.func @transform_2(%arg0: i32) -> (i32, i32) {
    %c0_i32 = arith.constant 0 : i32
    %c0_i32_0 = arith.constant 0 : i32
    %c0_i32_1 = arith.constant 0 : i32
    return %c0_i32, %c0_i32_0 : i32, i32
  }
  func.func @transform_3(%arg0: i32) -> (i32, i32) {
    %c0_i32 = arith.constant 0 : i32
    %c0_i32_0 = arith.constant 0 : i32
    %c0_i32_1 = arith.constant 0 : i32
    return %c0_i32, %c0_i32_0 : i32, i32
  }
  func.func @transform_4(%arg0: i32) -> (i32, i32) {
    %c0_i32 = arith.constant 0 : i32
    %c0_i32_0 = arith.constant 0 : i32
    return %arg0, %c0_i32 : i32, i32
  }
}

</mosaic_0001>

<llo_original>
// kernel: tpu_custom_call.1
$region0: #{tpu_custom_call.1}
  #allocation0 [shape = 'u32[]', space=smem, size = 0x4, offset = 0x4, fixed_abs, tag = 'smem constant byte address 0x4 - core index']
  #allocation1 [shape = 'u32[144,128]{1,0:T(1,128)}', space=vmem, size = 0x12000, scoped, tag = 'internal scratch']
  %s0 = inlined_call_operand.vmem [shape: f32[8,384], index: 0, kind: input, shape index: {}]
  %s1 = inlined_call_operand.vmem [shape: f32[256,80], index: 1, kind: input, shape index: {}]
  %s2 = inlined_call_operand.vmem [shape: f32[32,256], index: 2, kind: input, shape index: {}]
  %s3 = inlined_call_operand.vmem [shape: f32[32,1], index: 3, kind: input, shape index: {}]
  %s4 = inlined_call_operand.hbm [shape: f32[32,384], index: 4, kind: output, shape index: {}]
  %s5 = sld [smem:[#allocation0]]
  $region26: #{tpu_custom_call.1} parent=0
    _
  %s7 = ssub.s32 1, %s5
  %s8 = scalar_select 0, %s7, %s5
  $region1: #{tpu_custom_call.1} parent=0
    #allocation2 [shape = 'u8[49152]{0}', space=vmem, size = 0xc000, scoped, tag = 'output window, operand 0, single buffered']
    #allocation3 [shape = 's32[1]{0}', space=sflag, size = 0x4, scoped, tag = 'scoped memory for tpu_custom_call.1']
    %9 = vsyncpa [#allocation3], 0
    // Predicated region
    $region2: #{tpu_custom_call.1} parent=1 // pred_check
      _
    $region3: #{tpu_custom_call.1} parent=1 // pred_check_branch
      %11 = sbr.rel (0) target = $region5
    $region4: #{tpu_custom_call.1} parent=1 // pred_region
      _
    $region5: #{tpu_custom_call.1} parent=1 // pred_fallthru
      _
    // Predicated region
    $region6: #{tpu_custom_call.1} parent=1 // pred_check
      _
    $region7: #{tpu_custom_call.1} parent=1 // pred_check_branch
      %13 = sbr.rel (0) target = $region9
    $region8: #{tpu_custom_call.1} parent=1 // pred_region
      _
    $region9: #{tpu_custom_call.1} parent=1 // pred_fallthru
      _
    // Predicated region
    $region10: #{tpu_custom_call.1} parent=1 // pred_check
      _
    $region11: #{tpu_custom_call.1} parent=1 // pred_check_branch
      %15 = sbr.rel (0) target = $region13
    $region12: #{tpu_custom_call.1} parent=1 // pred_region
      _
    $region13: #{tpu_custom_call.1} parent=1 // pred_fallthru
      _
    // Predicated region
    $region14: #{tpu_custom_call.1} parent=1 // pred_check
      _
    $region15: #{tpu_custom_call.1} parent=1 // pred_check_branch
      %17 = sbr.rel (0) target = $region17
    $region16: #{tpu_custom_call.1} parent=1 // pred_region
      _
    $region17: #{tpu_custom_call.1} parent=1 // pred_fallthru
      _
    %v18 = vld [vmem:[%s0] sm:$0xff]
    %v19 = vld [vmem:[%s0 + $0x8] sm:$0xff]
    %v20 = vld [vmem:[%s0 + $0x10] sm:$0xff]
    %21 = vrot.lane.b32.xlu0 %v18, 19
    %v22 = vpop.permute.xlu0 %21
    %23 = vrot.lane.b32.xlu0 %v19, 19
    %v24 = vpop.permute.xlu0 %23
    %25 = vrot.lane.b32.xlu0 %v20, 19
    %v26 = vpop.permute.xlu0 %25
    %v27 = vlaneseq
    %v28 = vand.u32 %v27, 127
    %vm29 = vcmp.lt.s32.totalorder %v28, 19
    %v30 = vsel %vm29, %v24, %v26
    %v31 = vsel %vm29, %v22, %v24
    %v32 = vsel %vm29, %v26, %v22
    %33 = vrot.lane.b32.xlu0 %v18, 18
    %v34 = vpop.permute.xlu0 %33
    %35 = vrot.lane.b32.xlu0 %v19, 18
    %v36 = vpop.permute.xlu0 %35
    %37 = vrot.lane.b32.xlu0 %v20, 18
    %v38 = vpop.permute.xlu0 %37
    %vm39 = vcmp.lt.s32.totalorder %v28, 18
    %v40 = vsel %vm39, %v36, %v38
    %v41 = vsel %vm39, %v34, %v36
    %v42 = vsel %vm39, %v38, %v34
    %43 = vrot.lane.b32.xlu0 %v18, 17
    %v44 = vpop.permute.xlu0 %43
    %45 = vrot.lane.b32.xlu0 %v19, 17
    %v46 = vpop.permute.xlu0 %45
    %47 = vrot.lane.b32.xlu0 %v20, 17
    %v48 = vpop.permute.xlu0 %47
    %vm49 = vcmp.lt.s32.totalorder %v28, 17
    %v50 = vsel %vm49, %v46, %v48
    %v51 = vsel %vm49, %v44, %v46
    %v52 = vsel %vm49, %v48, %v44
    %53 = vrot.lane.b32.xlu0 %v18, 1
    %v54 = vpop.permute.xlu0 %53
    %55 = vrot.lane.b32.xlu0 %v19, 1
    %v56 = vpop.permute.xlu0 %55
    %57 = vrot.lane.b32.xlu0 %v20, 1
    %v58 = vpop.permute.xlu0 %57
    %vm59 = vcmp.lt.s32.totalorder %v28, 1
    %v60 = vsel %vm59, %v56, %v58
    %v61 = vsel %vm59, %v54, %v56
    %v62 = vsel %vm59, %v58, %v54
    %63 = vrot.lane.b32.xlu0 %v18, 127
    %v64 = vpop.permute.xlu0 %63
    %65 = vrot.lane.b32.xlu0 %v19, 127
    %v66 = vpop.permute.xlu0 %65
    %67 = vrot.lane.b32.xlu0 %v20, 127
    %v68 = vpop.permute.xlu0 %67
    %vm69 = vcmp.lt.s32.totalorder %v28, 127
    %v70 = vsel %vm69, %v66, %v68
    %v71 = vsel %vm69, %v64, %v66
    %v72 = vsel %vm69, %v68, %v64
    %73 = vrot.lane.b32.xlu0 %v18, 111
    %v74 = vpop.permute.xlu0 %73
    %75 = vrot.lane.b32.xlu0 %v19, 111
    %v76 = vpop.permute.xlu0 %75
    %77 = vrot.lane.b32.xlu0 %v20, 111
    %v78 = vpop.permute.xlu0 %77
    %vm79 = vcmp.lt.s32.totalorder %v28, 111
    %v80 = vsel %vm79, %v76, %v78
    %v81 = vsel %vm79, %v74, %v76
    %v82 = vsel %vm79, %v78, %v74
    %83 = vrot.lane.b32.xlu0 %v18, 110
    %v84 = vpop.permute.xlu0 %83
    %85 = vrot.lane.b32.xlu0 %v19, 110
    %v86 = vpop.permute.xlu0 %85
    %87 = vrot.lane.b32.xlu0 %v20, 110
    %v88 = vpop.permute.xlu0 %87
    %vm89 = vcmp.lt.s32.totalorder %v28, 110
    %v90 = vsel %vm89, %v86, %v88
    %v91 = vsel %vm89, %v84, %v86
    %v92 = vsel %vm89, %v88, %v84
    %93 = vrot.lane.b32.xlu0 %v18, 109
    %v94 = vpop.permute.xlu0 %93
    %95 = vrot.lane.b32.xlu0 %v19, 109
    %v96 = vpop.permute.xlu0 %95
    %97 = vrot.lane.b32.xlu0 %v20, 109
    %v98 = vpop.permute.xlu0 %97
    %vm99 = vcmp.lt.s32.totalorder %v28, 109
    %v100 = vsel %vm99, %v96, %v98
    %v101 = vsel %vm99, %v94, %v96
    %v102 = vsel %vm99, %v98, %v94
    %v103 = vld [vmem:[%s1] sm:$0xff]
    %v104 = vld [vmem:[%s1 + $0x8] sm:$0xff]
    %v105 = vld [vmem:[%s1 + $0x10] sm:$0xff]
    %v106 = vld [vmem:[%s1 + $0x18] sm:$0xff]
    %v107 = vld [vmem:[%s1 + $0x20] sm:$0xff]
    %v108 = vld [vmem:[%s1 + $0x28] sm:$0xff]
    %v109 = vld [vmem:[%s1 + $0x30] sm:$0xff]
    %v110 = vld [vmem:[%s1 + $0x38] sm:$0xff]
    %v111 = vld [vmem:[%s1 + $0x40] sm:$0xff]
    %v112 = vld [vmem:[%s1 + $0x48] sm:$0xff]
    %v113 = vld [vmem:[%s1 + $0x50] sm:$0xff]
    %v114 = vld [vmem:[%s1 + $0x58] sm:$0xff]
    %v115 = vld [vmem:[%s1 + $0x60] sm:$0xff]
    %v116 = vld [vmem:[%s1 + $0x68] sm:$0xff]
    %v117 = vld [vmem:[%s1 + $0x70] sm:$0xff]
    %v118 = vld [vmem:[%s1 + $0x78] sm:$0xff]
    %v119 = vld [vmem:[%s1 + $0x80] sm:$0xff]
    %v120 = vld [vmem:[%s1 + $0x88] sm:$0xff]
    %v121 = vld [vmem:[%s1 + $0x90] sm:$0xff]
    %v122 = vld [vmem:[%s1 + $0x98] sm:$0xff]
    %v123 = vld [vmem:[%s1 + $0xa0] sm:$0xff]
    %v124 = vld [vmem:[%s1 + $0xa8] sm:$0xff]
    %v125 = vld [vmem:[%s1 + $0xb0] sm:$0xff]
    %v126 = vld [vmem:[%s1 + $0xb8] sm:$0xff]
    %v127 = vld [vmem:[%s1 + $0xc0] sm:$0xff]
    %v128 = vld [vmem:[%s1 + $0xc8] sm:$0xff]
    %v129 = vld [vmem:[%s1 + $0xd0] sm:$0xff]
    %v130 = vld [vmem:[%s1 + $0xd8] sm:$0xff]
    %v131 = vld [vmem:[%s1 + $0xe0] sm:$0xff]
    %v132 = vld [vmem:[%s1 + $0xe8] sm:$0xff]
    %v133 = vld [vmem:[%s1 + $0xf0] sm:$0xff]
    %v134 = vld [vmem:[%s1 + $0xf8] sm:$0xff]
    %vm135 = vcmask 654336
    %v137 = vsel %vm135, %v103, 0
    %v140 = vsel %vm135, %v104, 0
    %v143 = vsel %vm135, %v105, 0
    %v146 = vsel %vm135, %v106, 0
    %v149 = vsel %vm135, %v107, 0
    %v152 = vsel %vm135, %v108, 0
    %v155 = vsel %vm135, %v109, 0
    %v158 = vsel %vm135, %v110, 0
    %v161 = vsel %vm135, %v111, 0
    %v164 = vsel %vm135, %v112, 0
    %v167 = vsel %vm135, %v113, 0
    %v170 = vsel %vm135, %v114, 0
    %v173 = vsel %vm135, %v115, 0
    %v176 = vsel %vm135, %v116, 0
    %v179 = vsel %vm135, %v117, 0
    %v182 = vsel %vm135, %v118, 0
    %v185 = vsel %vm135, %v119, 0
    %v188 = vsel %vm135, %v120, 0
    %v191 = vsel %vm135, %v121, 0
    %v194 = vsel %vm135, %v122, 0
    %v197 = vsel %vm135, %v123, 0
    %v200 = vsel %vm135, %v124, 0
    %v203 = vsel %vm135, %v125, 0
    %v206 = vsel %vm135, %v126, 0
    %v209 = vsel %vm135, %v127, 0
    %v212 = vsel %vm135, %v128, 0
    %v215 = vsel %vm135, %v129, 0
    %v218 = vsel %vm135, %v130, 0
    %v221 = vsel %vm135, %v131, 0
    %v224 = vsel %vm135, %v132, 0
    %v227 = vsel %vm135, %v133, 0
    %v230 = vsel %vm135, %v134, 0
    %232 = vmatprep.subr.mxu0 0.0
    %233 = vmatpush1.msra.mxu0 0.0
    %234 = vmatprep.subr.mxu0 0.0
    %235 = vmatpush1.msra.mxu0 0.0
    %236 = vmatprep.subr.mxu0 0.0
    %237 = vmatpush1.msra.mxu0 0.0
    %238 = vmatprep.subr.mxu0 0.0
    %239 = vmatpush1.msra.mxu0 0.0
    %240 = vmatprep.subr.mxu0 0.0
    %241 = vmatpush1.msra.mxu0 0.0
    %242 = vmatprep.subr.mxu0 0.0
    %243 = vmatpush1.msra.mxu0 0.0
    %244 = vmatprep.subr.mxu0 1.0
    %245 = vmatpush1.msra.mxu0 1.0
    %246 = vmatprep.subr.mxu0 %v100
    %247 = vmatpush1.msra.mxu0 %v101
    %248 = vmatprep.subr.mxu0 %v90
    %249 = vmatpush1.msra.mxu0 %v91
    %250 = vmatprep.subr.mxu0 %v80
    %251 = vmatpush1.msra.mxu0 %v81
    %252 = vmatprep.subr.mxu0 %v70
    %253 = vmatpush1.msra.mxu0 %v71
    %254 = vmatprep.subr.mxu0 %v19
    %255 = vmatpush1.msra.mxu0 %v18
    %256 = vmatprep.subr.mxu0 %v61
    %257 = vmatpush1.msra.mxu0 %v62
    %258 = vmatprep.subr.mxu0 %v51
    %259 = vmatpush1.msra.mxu0 %v52
    %260 = vmatprep.subr.mxu0 %v41
    %261 = vmatpush1.msra.mxu0 %v42
    %262 = vmatprep.subr.mxu0 %v31
    %263 = vmatpush1.msra.mxu0 %v32
    %264 = vmatprep.subr.mxu0 0.0
    %265 = vmatpush2.msra.mxu0 0.0
    %266 = vmatprep.subr.mxu0 0.0
    %267 = vmatpush2.msra.mxu0 0.0
    %268 = vmatprep.subr.mxu0 0.0
    %269 = vmatpush2.msra.mxu0 0.0
    %270 = vmatprep.subr.mxu0 0.0
    %271 = vmatpush2.msra.mxu0 0.0
    %272 = vmatprep.subr.mxu0 0.0
    %273 = vmatpush2.msra.mxu0 0.0
    %274 = vmatprep.subr.mxu0 0.0
    %275 = vmatpush2.msra.mxu0 0.0
    %276 = vmatprep.subr.mxu0 0.0
    %277 = vmatpush2.msra.mxu0 0.0
    %278 = vmatprep.subr.mxu0 0.0
    %279 = vmatpush2.msra.mxu0 0.0
    %280 = vmatprep.subr.mxu0 0.0
    %281 = vmatpush2.msra.mxu0 0.0
    %282 = vmatprep.subr.mxu0 0.0
    %283 = vmatpush2.msra.mxu0 0.0
    %284 = vmatprep.subr.mxu0 0.0
    %285 = vmatpush2.msra.mxu0 0.0
    %286 = vmatprep.subr.mxu0 0.0
    %287 = vmatpush2.msra.mxu0 0.0
    %288 = vmatprep.subr.mxu0 0.0
    %289 = vmatpush2.msra.mxu0 0.0
    %290 = vmatprep.subr.mxu0 0.0
    %291 = vmatpush2.msra.mxu0 0.0
    %292 = vmatprep.subr.mxu0 0.0
    %293 = vmatpush2.msra.mxu0 0.0
    %294 = vmatprep.subr.mxu0 0.0
    %295 = vmatpush2.msra.mxu0 0.0
    %296 = vmatprep.mubr.f32.mxu0 0.0
    %297 = vmatmul.mubr.f32.gmra.mxu0 %v137
    %v298 = vpop.f32.mrf.mxu0
    %v299 = vadd.f32 0.0, %v298
    %v300 = vpop.f32.mrf.mxu0
    %v301 = vadd.f32 0.0, %v300
    %302 = vmatprep.mubr.f32.mxu0 0.0
    %303 = vmatmul.mubr.f32.gmra.mxu0 %v140
    %v304 = vpop.f32.mrf.mxu0
    %v305 = vadd.f32 0.0, %v304
    %v306 = vpop.f32.mrf.mxu0
    %v307 = vadd.f32 0.0, %v306
    %308 = vmatprep.mubr.f32.mxu0 0.0
    %309 = vmatmul.mubr.f32.gmra.mxu0 %v143
    %v310 = vpop.f32.mrf.mxu0
    %v311 = vadd.f32 0.0, %v310
    %v312 = vpop.f32.mrf.mxu0
    %v313 = vadd.f32 0.0, %v312
    %314 = vmatprep.mubr.f32.mxu0 0.0
    %315 = vmatmul.mubr.f32.gmra.mxu0 %v146
    %v316 = vpop.f32.mrf.mxu0
    %v317 = vadd.f32 0.0, %v316
    %v318 = vpop.f32.mrf.mxu0
    %v319 = vadd.f32 0.0, %v318
    %320 = vmatprep.mubr.f32.mxu0 0.0
    %321 = vmatmul.mubr.f32.gmra.mxu0 %v149
    %v322 = vpop.f32.mrf.mxu0
    %v323 = vadd.f32 0.0, %v322
    %v324 = vpop.f32.mrf.mxu0
    %v325 = vadd.f32 0.0, %v324
    %326 = vmatprep.mubr.f32.mxu0 0.0
    %327 = vmatmul.mubr.f32.gmra.mxu0 %v152
    %v328 = vpop.f32.mrf.mxu0
    %v329 = vadd.f32 0.0, %v328
    %v330 = vpop.f32.mrf.mxu0
    %v331 = vadd.f32 0.0, %v330
    %332 = vmatprep.mubr.f32.mxu0 0.0
    %333 = vmatmul.mubr.f32.gmra.mxu0 %v155
    %v334 = vpop.f32.mrf.mxu0
    %v335 = vadd.f32 0.0, %v334
    %v336 = vpop.f32.mrf.mxu0
    %v337 = vadd.f32 0.0, %v336
    %338 = vmatprep.mubr.f32.mxu0 0.0
    %339 = vmatmul.mubr.f32.gmra.mxu0 %v158
    %v340 = vpop.f32.mrf.mxu0
    %v341 = vadd.f32 0.0, %v340
    %v342 = vpop.f32.mrf.mxu0
    %v343 = vadd.f32 0.0, %v342
    %344 = vmatprep.mubr.f32.mxu0 0.0
    %345 = vmatmul.mubr.f32.gmra.mxu0 %v161
    %v346 = vpop.f32.mrf.mxu0
    %v347 = vadd.f32 0.0, %v346
    %v348 = vpop.f32.mrf.mxu0
    %v349 = vadd.f32 0.0, %v348
    %350 = vmatprep.mubr.f32.mxu0 0.0
    %351 = vmatmul.mubr.f32.gmra.mxu0 %v164
    %v352 = vpop.f32.mrf.mxu0
    %v353 = vadd.f32 0.0, %v352
    %v354 = vpop.f32.mrf.mxu0
    %v355 = vadd.f32 0.0, %v354
    %356 = vmatprep.mubr.f32.mxu0 0.0
    %357 = vmatmul.mubr.f32.gmra.mxu0 %v167
    %v358 = vpop.f32.mrf.mxu0
    %v359 = vadd.f32 0.0, %v358
    %v360 = vpop.f32.mrf.mxu0
    %v361 = vadd.f32 0.0, %v360
    %362 = vmatprep.mubr.f32.mxu0 0.0
    %363 = vmatmul.mubr.f32.gmra.mxu0 %v170
    %v364 = vpop.f32.mrf.mxu0
    %v365 = vadd.f32 0.0, %v364
    %v366 = vpop.f32.mrf.mxu0
    %v367 = vadd.f32 0.0, %v366
    %368 = vmatprep.mubr.f32.mxu0 0.0
    %369 = vmatmul.mubr.f32.gmra.mxu0 %v173
    %v370 = vpop.f32.mrf.mxu0
    %v371 = vadd.f32 0.0, %v370
    %v372 = vpop.f32.mrf.mxu0
    %v373 = vadd.f32 0.0, %v372
    %374 = vmatprep.mubr.f32.mxu0 0.0
    %375 = vmatmul.mubr.f32.gmra.mxu0 %v176
    %v376 = vpop.f32.mrf.mxu0
    %v377 = vadd.f32 0.0, %v376
    %v378 = vpop.f32.mrf.mxu0
    %v379 = vadd.f32 0.0, %v378
    %380 = vmatprep.mubr.f32.mxu0 0.0
    %381 = vmatmul.mubr.f32.gmra.mxu0 %v179
    %v382 = vpop.f32.mrf.mxu0
    %v383 = vadd.f32 0.0, %v382
    %v384 = vpop.f32.mrf.mxu0
    %v385 = vadd.f32 0.0, %v384
    %386 = vmatprep.mubr.f32.mxu0 0.0
    %387 = vmatmul.mubr.f32.gmra.mxu0 %v182
    %v388 = vpop.f32.mrf.mxu0
    %v389 = vadd.f32 0.0, %v388
    %v390 = vpop.f32.mrf.mxu0
    %v391 = vadd.f32 0.0, %v390
    %392 = vmatprep.mubr.f32.mxu0 0.0
    %393 = vmatmul.mubr.f32.gmra.mxu0 %v185
    %v394 = vpop.f32.mrf.mxu0
    %v395 = vadd.f32 0.0, %v394
    %v396 = vpop.f32.mrf.mxu0
    %v397 = vadd.f32 0.0, %v396
    %398 = vmatprep.mubr.f32.mxu0 0.0
    %399 = vmatmul.mubr.f32.gmra.mxu0 %v188
    %v400 = vpop.f32.mrf.mxu0
    %v401 = vadd.f32 0.0, %v400
    %v402 = vpop.f32.mrf.mxu0
    %v403 = vadd.f32 0.0, %v402
    %404 = vmatprep.mubr.f32.mxu0 0.0
    %405 = vmatmul.mubr.f32.gmra.mxu0 %v191
    %v406 = vpop.f32.mrf.mxu0
    %v407 = vadd.f32 0.0, %v406
    %v408 = vpop.f32.mrf.mxu0
    %v409 = vadd.f32 0.0, %v408
    %410 = vmatprep.mubr.f32.mxu0 0.0
    %411 = vmatmul.mubr.f32.gmra.mxu0 %v194
    %v412 = vpop.f32.mrf.mxu0
    %v413 = vadd.f32 0.0, %v412
    %v414 = vpop.f32.mrf.mxu0
    %v415 = vadd.f32 0.0, %v414
    %416 = vmatprep.mubr.f32.mxu0 0.0
    %417 = vmatmul.mubr.f32.gmra.mxu0 %v197
    %v418 = vpop.f32.mrf.mxu0
    %v419 = vadd.f32 0.0, %v418
    %v420 = vpop.f32.mrf.mxu0
    %v421 = vadd.f32 0.0, %v420
    %422 = vmatprep.mubr.f32.mxu0 0.0
    %423 = vmatmul.mubr.f32.gmra.mxu0 %v200
    %v424 = vpop.f32.mrf.mxu0
    %v425 = vadd.f32 0.0, %v424
    %v426 = vpop.f32.mrf.mxu0
    %v427 = vadd.f32 0.0, %v426
    %428 = vmatprep.mubr.f32.mxu0 0.0
    %429 = vmatmul.mubr.f32.gmra.mxu0 %v203
    %v430 = vpop.f32.mrf.mxu0
    %v431 = vadd.f32 0.0, %v430
    %v432 = vpop.f32.mrf.mxu0
    %v433 = vadd.f32 0.0, %v432
    %434 = vmatprep.mubr.f32.mxu0 0.0
    %435 = vmatmul.mubr.f32.gmra.mxu0 %v206
    %v436 = vpop.f32.mrf.mxu0
    %v437 = vadd.f32 0.0, %v436
    %v438 = vpop.f32.mrf.mxu0
    %v439 = vadd.f32 0.0, %v438
    %440 = vmatprep.mubr.f32.mxu0 0.0
    %441 = vmatmul.mubr.f32.gmra.mxu0 %v209
    %v442 = vpop.f32.mrf.mxu0
    %v443 = vadd.f32 0.0, %v442
    %v444 = vpop.f32.mrf.mxu0
    %v445 = vadd.f32 0.0, %v444
    %446 = vmatprep.mubr.f32.mxu0 0.0
    %447 = vmatmul.mubr.f32.gmra.mxu0 %v212
    %v448 = vpop.f32.mrf.mxu0
    %v449 = vadd.f32 0.0, %v448
    %v450 = vpop.f32.mrf.mxu0
    %v451 = vadd.f32 0.0, %v450
    %452 = vmatprep.mubr.f32.mxu0 0.0
    %453 = vmatmul.mubr.f32.gmra.mxu0 %v215
    %v454 = vpop.f32.mrf.mxu0
    %v455 = vadd.f32 0.0, %v454
    %v456 = vpop.f32.mrf.mxu0
    %v457 = vadd.f32 0.0, %v456
    %458 = vmatprep.mubr.f32.mxu0 0.0
    %459 = vmatmul.mubr.f32.gmra.mxu0 %v218
    %v460 = vpop.f32.mrf.mxu0
    %v461 = vadd.f32 0.0, %v460
    %v462 = vpop.f32.mrf.mxu0
    %v463 = vadd.f32 0.0, %v462
    %464 = vmatprep.mubr.f32.mxu0 0.0
    %465 = vmatmul.mubr.f32.gmra.mxu0 %v221
    %v466 = vpop.f32.mrf.mxu0
    %v467 = vadd.f32 0.0, %v466
    %v468 = vpop.f32.mrf.mxu0
    %v469 = vadd.f32 0.0, %v468
    %470 = vmatprep.mubr.f32.mxu0 0.0
    %471 = vmatmul.mubr.f32.gmra.mxu0 %v224
    %v472 = vpop.f32.mrf.mxu0
    %v473 = vadd.f32 0.0, %v472
    %v474 = vpop.f32.mrf.mxu0
    %v475 = vadd.f32 0.0, %v474
    %476 = vmatprep.mubr.f32.mxu0 0.0
    %477 = vmatmul.mubr.f32.gmra.mxu0 %v227
    %v478 = vpop.f32.mrf.mxu0
    %v479 = vadd.f32 0.0, %v478
    %v480 = vpop.f32.mrf.mxu0
    %v481 = vadd.f32 0.0, %v480
    %482 = vmatprep.mubr.f32.mxu0 0.0
    %483 = vmatmul.mubr.f32.gmra.mxu0 %v230
    %v484 = vpop.f32.mrf.mxu0
    %v485 = vadd.f32 0.0, %v484
    %v486 = vpop.f32.mrf.mxu0
    %v487 = vadd.f32 0.0, %v486
    %488 = vdwg.mxu0
    %489 = vmatprep.subr.mxu0 0.0
    %490 = vmatpush1.msra.mxu0 0.0
    %491 = vmatprep.subr.mxu0 0.0
    %492 = vmatpush1.msra.mxu0 0.0
    %493 = vmatprep.subr.mxu0 0.0
    %494 = vmatpush1.msra.mxu0 0.0
    %495 = vmatprep.subr.mxu0 0.0
    %496 = vmatpush1.msra.mxu0 0.0
    %497 = vmatprep.subr.mxu0 0.0
    %498 = vmatpush1.msra.mxu0 0.0
    %499 = vmatprep.subr.mxu0 0.0
    %500 = vmatpush1.msra.mxu0 0.0
    %501 = vmatprep.subr.mxu0 0.0
    %502 = vmatpush1.msra.mxu0 1.0
    %503 = vmatprep.subr.mxu0 0.0
    %504 = vmatpush1.msra.mxu0 %v102
    %505 = vmatprep.subr.mxu0 0.0
    %506 = vmatpush1.msra.mxu0 %v92
    %507 = vmatprep.subr.mxu0 0.0
    %508 = vmatpush1.msra.mxu0 %v82
    %509 = vmatprep.subr.mxu0 0.0
    %510 = vmatpush1.msra.mxu0 %v72
    %511 = vmatprep.subr.mxu0 0.0
    %512 = vmatpush1.msra.mxu0 %v20
    %513 = vmatprep.subr.mxu0 0.0
    %514 = vmatpush1.msra.mxu0 %v60
    %515 = vmatprep.subr.mxu0 0.0
    %516 = vmatpush1.msra.mxu0 %v50
    %517 = vmatprep.subr.mxu0 0.0
    %518 = vmatpush1.msra.mxu0 %v40
    %519 = vmatprep.subr.mxu0 0.0
    %520 = vmatpush1.msra.mxu0 %v30
    %521 = vmatprep.subr.mxu0 0.0
    %522 = vmatpush2.msra.mxu0 0.0
    %523 = vmatprep.subr.mxu0 0.0
    %524 = vmatpush2.msra.mxu0 0.0
    %525 = vmatprep.subr.mxu0 0.0
    %526 = vmatpush2.msra.mxu0 0.0
    %527 = vmatprep.subr.mxu0 0.0
    %528 = vmatpush2.msra.mxu0 0.0
    %529 = vmatprep.subr.mxu0 0.0
    %530 = vmatpush2.msra.mxu0 0.0
    %531 = vmatprep.subr.mxu0 0.0
    %532 = vmatpush2.msra.mxu0 0.0
    %533 = vmatprep.subr.mxu0 0.0
    %534 = vmatpush2.msra.mxu0 0.0
    %535 = vmatprep.subr.mxu0 0.0
    %536 = vmatpush2.msra.mxu0 0.0
    %537 = vmatprep.subr.mxu0 0.0
    %538 = vmatpush2.msra.mxu0 0.0
    %539 = vmatprep.subr.mxu0 0.0
    %540 = vmatpush2.msra.mxu0 0.0
    %541 = vmatprep.subr.mxu0 0.0
    %542 = vmatpush2.msra.mxu0 0.0
    %543 = vmatprep.subr.mxu0 0.0
    %544 = vmatpush2.msra.mxu0 0.0
    %545 = vmatprep.subr.mxu0 0.0
    %546 = vmatpush2.msra.mxu0 0.0
    %547 = vmatprep.subr.mxu0 0.0
    %548 = vmatpush2.msra.mxu0 0.0
    %549 = vmatprep.subr.mxu0 0.0
    %550 = vmatpush2.msra.mxu0 0.0
    %551 = vmatprep.subr.mxu0 0.0
    %552 = vmatpush2.msra.mxu0 0.0
    %553 = vmatprep.mubr.f32.mxu0 0.0
    %554 = vmatmul.mubr.f32.gmra.mxu0 %v137
    %v555 = vpop.f32.mrf.mxu0
    %v556 = vadd.f32 0.0, %v555
    %v557 = vpop.f32.mrf.mxu0
    %558 = vmatprep.mubr.f32.mxu0 0.0
    %559 = vmatmul.mubr.f32.gmra.mxu0 %v140
    %v560 = vpop.f32.mrf.mxu0
    %v561 = vadd.f32 0.0, %v560
    %v562 = vpop.f32.mrf.mxu0
    %563 = vmatprep.mubr.f32.mxu0 0.0
    %564 = vmatmul.mubr.f32.gmra.mxu0 %v143
    %v565 = vpop.f32.mrf.mxu0
    %v566 = vadd.f32 0.0, %v565
    %v567 = vpop.f32.mrf.mxu0
    %568 = vmatprep.mubr.f32.mxu0 0.0
    %569 = vmatmul.mubr.f32.gmra.mxu0 %v146
    %v570 = vpop.f32.mrf.mxu0
    %v571 = vadd.f32 0.0, %v570
    %v572 = vpop.f32.mrf.mxu0
    %573 = vmatprep.mubr.f32.mxu0 0.0
    %574 = vmatmul.mubr.f32.gmra.mxu0 %v149
    %v575 = vpop.f32.mrf.mxu0
    %v576 = vadd.f32 0.0, %v575
    %v577 = vpop.f32.mrf.mxu0
    %578 = vmatprep.mubr.f32.mxu0 0.0
    %579 = vmatmul.mubr.f32.gmra.mxu0 %v152
    %v580 = vpop.f32.mrf.mxu0
    %v581 = vadd.f32 0.0, %v580
    %v582 = vpop.f32.mrf.mxu0
    %583 = vmatprep.mubr.f32.mxu0 0.0
    %584 = vmatmul.mubr.f32.gmra.mxu0 %v155
    %v585 = vpop.f32.mrf.mxu0
    %v586 = vadd.f32 0.0, %v585
    %v587 = vpop.f32.mrf.mxu0
    %588 = vmatprep.mubr.f32.mxu0 0.0
    %589 = vmatmul.mubr.f32.gmra.mxu0 %v158
    %v590 = vpop.f32.mrf.mxu0
    %v591 = vadd.f32 0.0, %v590
    %v592 = vpop.f32.mrf.mxu0
    %593 = vmatprep.mubr.f32.mxu0 0.0
    %594 = vmatmul.mubr.f32.gmra.mxu0 %v161
    %v595 = vpop.f32.mrf.mxu0
    %v596 = vadd.f32 0.0, %v595
    %v597 = vpop.f32.mrf.mxu0
    %598 = vmatprep.mubr.f32.mxu0 0.0
    %599 = vmatmul.mubr.f32.gmra.mxu0 %v164
    %v600 = vpop.f32.mrf.mxu0
    %v601 = vadd.f32 0.0, %v600
    %v602 = vpop.f32.mrf.mxu0
    %603 = vmatprep.mubr.f32.mxu0 0.0
    %604 = vmatmul.mubr.f32.gmra.mxu0 %v167
    %v605 = vpop.f32.mrf.mxu0
    %v606 = vadd.f32 0.0, %v605
    %v607 = vpop.f32.mrf.mxu0
    %608 = vmatprep.mubr.f32.mxu0 0.0
    %609 = vmatmul.mubr.f32.gmra.mxu0 %v170
    %v610 = vpop.f32.mrf.mxu0
    %v611 = vadd.f32 0.0, %v610
    %v612 = vpop.f32.mrf.mxu0
    %613 = vmatprep.mubr.f32.mxu0 0.0
    %614 = vmatmul.mubr.f32.gmra.mxu0 %v173
    %v615 = vpop.f32.mrf.mxu0
    %v616 = vadd.f32 0.0, %v615
    %v617 = vpop.f32.mrf.mxu0
    %618 = vmatprep.mubr.f32.mxu0 0.0
    %619 = vmatmul.mubr.f32.gmra.mxu0 %v176
    %v620 = vpop.f32.mrf.mxu0
    %v621 = vadd.f32 0.0, %v620
    %v622 = vpop.f32.mrf.mxu0
    %623 = vmatprep.mubr.f32.mxu0 0.0
    %624 = vmatmul.mubr.f32.gmra.mxu0 %v179
    %v625 = vpop.f32.mrf.mxu0
    %v626 = vadd.f32 0.0, %v625
    %v627 = vpop.f32.mrf.mxu0
    %628 = vmatprep.mubr.f32.mxu0 0.0
    %629 = vmatmul.mubr.f32.gmra.mxu0 %v182
    %v630 = vpop.f32.mrf.mxu0
    %v631 = vadd.f32 0.0, %v630
    %v632 = vpop.f32.mrf.mxu0
    %633 = vmatprep.mubr.f32.mxu0 0.0
    %634 = vmatmul.mubr.f32.gmra.mxu0 %v185
    %v635 = vpop.f32.mrf.mxu0
    %v636 = vadd.f32 0.0, %v635
    %v637 = vpop.f32.mrf.mxu0
    %638 = vmatprep.mubr.f32.mxu0 0.0
    %639 = vmatmul.mubr.f32.gmra.mxu0 %v188
    %v640 = vpop.f32.mrf.mxu0
    %v641 = vadd.f32 0.0, %v640
    %v642 = vpop.f32.mrf.mxu0
    %643 = vmatprep.mubr.f32.mxu0 0.0
    %644 = vmatmul.mubr.f32.gmra.mxu0 %v191
    %v645 = vpop.f32.mrf.mxu0
    %v646 = vadd.f32 0.0, %v645
    %v647 = vpop.f32.mrf.mxu0
    %648 = vmatprep.mubr.f32.mxu0 0.0
    %649 = vmatmul.mubr.f32.gmra.mxu0 %v194
    %v650 = vpop.f32.mrf.mxu0
    %v651 = vadd.f32 0.0, %v650
    %v652 = vpop.f32.mrf.mxu0
    %653 = vmatprep.mubr.f32.mxu0 0.0
    %654 = vmatmul.mubr.f32.gmra.mxu0 %v197
    %v655 = vpop.f32.mrf.mxu0
    %v656 = vadd.f32 0.0, %v655
    %v657 = vpop.f32.mrf.mxu0
    %658 = vmatprep.mubr.f32.mxu0 0.0
    %659 = vmatmul.mubr.f32.gmra.mxu0 %v200
    %v660 = vpop.f32.mrf.mxu0
    %v661 = vadd.f32 0.0, %v660
    %v662 = vpop.f32.mrf.mxu0
    %663 = vmatprep.mubr.f32.mxu0 0.0
    %664 = vmatmul.mubr.f32.gmra.mxu0 %v203
    %v665 = vpop.f32.mrf.mxu0
    %v666 = vadd.f32 0.0, %v665
    %v667 = vpop.f32.mrf.mxu0
    %668 = vmatprep.mubr.f32.mxu0 0.0
    %669 = vmatmul.mubr.f32.gmra.mxu0 %v206
    %v670 = vpop.f32.mrf.mxu0
    %v671 = vadd.f32 0.0, %v670
    %v672 = vpop.f32.mrf.mxu0
    %673 = vmatprep.mubr.f32.mxu0 0.0
    %674 = vmatmul.mubr.f32.gmra.mxu0 %v209
    %v675 = vpop.f32.mrf.mxu0
    %v676 = vadd.f32 0.0, %v675
    %v677 = vpop.f32.mrf.mxu0
    %678 = vmatprep.mubr.f32.mxu0 0.0
    %679 = vmatmul.mubr.f32.gmra.mxu0 %v212
    %v680 = vpop.f32.mrf.mxu0
    %v681 = vadd.f32 0.0, %v680
    %v682 = vpop.f32.mrf.mxu0
    %683 = vmatprep.mubr.f32.mxu0 0.0
    %684 = vmatmul.mubr.f32.gmra.mxu0 %v215
    %v685 = vpop.f32.mrf.mxu0
    %v686 = vadd.f32 0.0, %v685
    %v687 = vpop.f32.mrf.mxu0
    %688 = vmatprep.mubr.f32.mxu0 0.0
    %689 = vmatmul.mubr.f32.gmra.mxu0 %v218
    %v690 = vpop.f32.mrf.mxu0
    %v691 = vadd.f32 0.0, %v690
    %v692 = vpop.f32.mrf.mxu0
    %693 = vmatprep.mubr.f32.mxu0 0.0
    %694 = vmatmul.mubr.f32.gmra.mxu0 %v221
    %v695 = vpop.f32.mrf.mxu0
    %v696 = vadd.f32 0.0, %v695
    %v697 = vpop.f32.mrf.mxu0
    %698 = vmatprep.mubr.f32.mxu0 0.0
    %699 = vmatmul.mubr.f32.gmra.mxu0 %v224
    %v700 = vpop.f32.mrf.mxu0
    %v701 = vadd.f32 0.0, %v700
    %v702 = vpop.f32.mrf.mxu0
    %703 = vmatprep.mubr.f32.mxu0 0.0
    %704 = vmatmul.mubr.f32.gmra.mxu0 %v227
    %v705 = vpop.f32.mrf.mxu0
    %v706 = vadd.f32 0.0, %v705
    %v707 = vpop.f32.mrf.mxu0
    %708 = vmatprep.mubr.f32.mxu0 0.0
    %709 = vmatmul.mubr.f32.gmra.mxu0 %v230
    %v710 = vpop.f32.mrf.mxu0
    %v711 = vadd.f32 0.0, %v710
    %v712 = vpop.f32.mrf.mxu0
    %713 = vdwg.mxu0
    %v714 = vtanh.pop %v299
    %v715 = vtanh.pop %v301
    %v716 = vtanh.pop %v556
    %v717 = vtanh.pop %v305
    %v718 = vtanh.pop %v307
    %v719 = vtanh.pop %v561
    %v720 = vtanh.pop %v311
    %v721 = vtanh.pop %v313
    %v722 = vtanh.pop %v566
    %v723 = vtanh.pop %v317
    %v724 = vtanh.pop %v319
    %v725 = vtanh.pop %v571
    %v726 = vtanh.pop %v323
    %v727 = vtanh.pop %v325
    %v728 = vtanh.pop %v576
    %v729 = vtanh.pop %v329
    %v730 = vtanh.pop %v331
    %v731 = vtanh.pop %v581
    %v732 = vtanh.pop %v335
    %v733 = vtanh.pop %v337
    %v734 = vtanh.pop %v586
    %v735 = vtanh.pop %v341
    %v736 = vtanh.pop %v343
    %v737 = vtanh.pop %v591
    %v738 = vtanh.pop %v347
    %v739 = vtanh.pop %v349
    %v740 = vtanh.pop %v596
    %v741 = vtanh.pop %v353
    %v742 = vtanh.pop %v355
    %v743 = vtanh.pop %v601
    %v744 = vtanh.pop %v359
    %v745 = vtanh.pop %v361
    %v746 = vtanh.pop %v606
    %v747 = vtanh.pop %v365
    %v748 = vtanh.pop %v367
    %v749 = vtanh.pop %v611
    %v750 = vtanh.pop %v371
    %v751 = vtanh.pop %v373
    %v752 = vtanh.pop %v616
    %v753 = vtanh.pop %v377
    %v754 = vtanh.pop %v379
    %v755 = vtanh.pop %v621
    %v756 = vtanh.pop %v383
    %v757 = vtanh.pop %v385
    %v758 = vtanh.pop %v626
    %v759 = vtanh.pop %v389
    %v760 = vtanh.pop %v391
    %v761 = vtanh.pop %v631
    %v762 = vtanh.pop %v395
    %v763 = vtanh.pop %v397
    %v764 = vtanh.pop %v636
    %v765 = vtanh.pop %v401
    %v766 = vtanh.pop %v403
    %v767 = vtanh.pop %v641
    %v768 = vtanh.pop %v407
    %v769 = vtanh.pop %v409
    %v770 = vtanh.pop %v646
    %v771 = vtanh.pop %v413
    %v772 = vtanh.pop %v415
    %v773 = vtanh.pop %v651
    %v774 = vtanh.pop %v419
    %v775 = vtanh.pop %v421
    %v776 = vtanh.pop %v656
    %v777 = vtanh.pop %v425
    %v778 = vtanh.pop %v427
    %v779 = vtanh.pop %v661
    %v780 = vtanh.pop %v431
    %v781 = vtanh.pop %v433
    %v782 = vtanh.pop %v666
    %v783 = vtanh.pop %v437
    %v784 = vtanh.pop %v439
    %v785 = vtanh.pop %v671
    %v786 = vtanh.pop %v443
    %v787 = vtanh.pop %v445
    %v788 = vtanh.pop %v676
    %v789 = vtanh.pop %v449
    %v790 = vtanh.pop %v451
    %v791 = vtanh.pop %v681
    %v792 = vtanh.pop %v455
    %v793 = vtanh.pop %v457
    %v794 = vtanh.pop %v686
    %v795 = vtanh.pop %v461
    %v796 = vtanh.pop %v463
    %v797 = vtanh.pop %v691
    %v798 = vtanh.pop %v467
    %v799 = vtanh.pop %v469
    %v800 = vtanh.pop %v696
    %v801 = vtanh.pop %v473
    %v802 = vtanh.pop %v475
    %v803 = vtanh.pop %v701
    %v804 = vtanh.pop %v479
    %v805 = vtanh.pop %v481
    %v806 = vtanh.pop %v706
    %v807 = vtanh.pop %v485
    %v808 = vtanh.pop %v487
    %v809 = vtanh.pop %v711
    %v810 = vld [vmem:[%s2] sm:$0xff]
    %v811 = vld [vmem:[%s2 + $0x8] sm:$0xff]
    %v812 = vld [vmem:[%s2 + $0x10] sm:$0xff]
    %v813 = vld [vmem:[%s2 + $0x18] sm:$0xff]
    %v814 = vld [vmem:[%s2 + $0x20] sm:$0xff]
    %v815 = vld [vmem:[%s2 + $0x28] sm:$0xff]
    %v816 = vld [vmem:[%s2 + $0x30] sm:$0xff]
    %v817 = vld [vmem:[%s2 + $0x38] sm:$0xff]
    %v818 = vld [vmem:[%s3] sm:$0xff]
    %v819 = vld [vmem:[%s3 + $0x8] sm:$0xff]
    %v820 = vld [vmem:[%s3 + $0x10] sm:$0xff]
    %v821 = vld [vmem:[%s3 + $0x18] sm:$0xff]
    %823 = vset.pattern.permute.xlu0 0
    %824 = vperm.xlu0 %823, %v818
    %v825 = vpop.permute.xlu0 %824
    %828 = vset.pattern.permute.xlu0 0
    %829 = vperm.xlu0 %828, %v819
    %v830 = vpop.permute.xlu0 %829
    %833 = vset.pattern.permute.xlu0 0
    %834 = vperm.xlu0 %833, %v820
    %v835 = vpop.permute.xlu0 %834
    %838 = vset.pattern.permute.xlu0 0
    %839 = vperm.xlu0 %838, %v821
    %v840 = vpop.permute.xlu0 %839
    %842 = vmatprep.subr.mxu0 %v760
    %843 = vmatpush1.msra.mxu0 %v759
    %844 = vmatprep.subr.mxu0 %v757
    %845 = vmatpush1.msra.mxu0 %v756
    %846 = vmatprep.subr.mxu0 %v754
    %847 = vmatpush1.msra.mxu0 %v753
    %848 = vmatprep.subr.mxu0 %v751
    %849 = vmatpush1.msra.mxu0 %v750
    %850 = vmatprep.subr.mxu0 %v748
    %851 = vmatpush1.msra.mxu0 %v747
    %852 = vmatprep.subr.mxu0 %v745
    %853 = vmatpush1.msra.mxu0 %v744
    %854 = vmatprep.subr.mxu0 %v742
    %855 = vmatpush1.msra.mxu0 %v741
    %856 = vmatprep.subr.mxu0 %v739
    %857 = vmatpush1.msra.mxu0 %v738
    %858 = vmatprep.subr.mxu0 %v736
    %859 = vmatpush1.msra.mxu0 %v735
    %860 = vmatprep.subr.mxu0 %v733
    %861 = vmatpush1.msra.mxu0 %v732
    %862 = vmatprep.subr.mxu0 %v730
    %863 = vmatpush1.msra.mxu0 %v729
    %864 = vmatprep.subr.mxu0 %v727
    %865 = vmatpush1.msra.mxu0 %v726
    %866 = vmatprep.subr.mxu0 %v724
    %867 = vmatpush1.msra.mxu0 %v723
    %868 = vmatprep.subr.mxu0 %v721
    %869 = vmatpush1.msra.mxu0 %v720
    %870 = vmatprep.subr.mxu0 %v718
    %871 = vmatpush1.msra.mxu0 %v717
    %872 = vmatprep.subr.mxu0 %v715
    %873 = vmatpush1.msra.mxu0 %v714
    %874 = vmatprep.subr.mxu0 %v808
    %875 = vmatpush2.msra.mxu0 %v807
    %876 = vmatprep.subr.mxu0 %v805
    %877 = vmatpush2.msra.mxu0 %v804
    %878 = vmatprep.subr.mxu0 %v802
    %879 = vmatpush2.msra.mxu0 %v801
    %880 = vmatprep.subr.mxu0 %v799
    %881 = vmatpush2.msra.mxu0 %v798
    %882 = vmatprep.subr.mxu0 %v796
    %883 = vmatpush2.msra.mxu0 %v795
    %884 = vmatprep.subr.mxu0 %v793
    %885 = vmatpush2.msra.mxu0 %v792
    %886 = vmatprep.subr.mxu0 %v790
    %887 = vmatpush2.msra.mxu0 %v789
    %888 = vmatprep.subr.mxu0 %v787
    %889 = vmatpush2.msra.mxu0 %v786
    %890 = vmatprep.subr.mxu0 %v784
    %891 = vmatpush2.msra.mxu0 %v783
    %892 = vmatprep.subr.mxu0 %v781
    %893 = vmatpush2.msra.mxu0 %v780
    %894 = vmatprep.subr.mxu0 %v778
    %895 = vmatpush2.msra.mxu0 %v777
    %896 = vmatprep.subr.mxu0 %v775
    %897 = vmatpush2.msra.mxu0 %v774
    %898 = vmatprep.subr.mxu0 %v772
    %899 = vmatpush2.msra.mxu0 %v771
    %900 = vmatprep.subr.mxu0 %v769
    %901 = vmatpush2.msra.mxu0 %v768
    %902 = vmatprep.subr.mxu0 %v766
    %903 = vmatpush2.msra.mxu0 %v765
    %904 = vmatprep.subr.mxu0 %v763
    %905 = vmatpush2.msra.mxu0 %v762
    %906 = vmatprep.mubr.f32.mxu0 %v811
    %907 = vmatmul.mubr.f32.gmra.mxu0 %v810
    %v908 = vpop.f32.mrf.mxu0
    %v909 = vadd.f32 %v825, %v908
    %v910 = vpop.f32.mrf.mxu0
    %v911 = vadd.f32 %v825, %v910
    %912 = vmatprep.mubr.f32.mxu0 %v813
    %913 = vmatmul.mubr.f32.gmra.mxu0 %v812
    %v914 = vpop.f32.mrf.mxu0
    %v915 = vadd.f32 %v830, %v914
    %v916 = vpop.f32.mrf.mxu0
    %v917 = vadd.f32 %v830, %v916
    %918 = vmatprep.mubr.f32.mxu0 %v815
    %919 = vmatmul.mubr.f32.gmra.mxu0 %v814
    %v920 = vpop.f32.mrf.mxu0
    %v921 = vadd.f32 %v835, %v920
    %v922 = vpop.f32.mrf.mxu0
    %v923 = vadd.f32 %v835, %v922
    %924 = vmatprep.mubr.f32.mxu0 %v817
    %925 = vmatmul.mubr.f32.gmra.mxu0 %v816
    %v926 = vpop.f32.mrf.mxu0
    %v927 = vadd.f32 %v840, %v926
    %v928 = vpop.f32.mrf.mxu0
    %v929 = vadd.f32 %v840, %v928
    %930 = vdwg.mxu0
    %931 = vmatprep.subr.mxu0 0.0
    %932 = vmatpush1.msra.mxu0 %v761
    %933 = vmatprep.subr.mxu0 0.0
    %934 = vmatpush1.msra.mxu0 %v758
    %935 = vmatprep.subr.mxu0 0.0
    %936 = vmatpush1.msra.mxu0 %v755
    %937 = vmatprep.subr.mxu0 0.0
    %938 = vmatpush1.msra.mxu0 %v752
    %939 = vmatprep.subr.mxu0 0.0
    %940 = vmatpush1.msra.mxu0 %v749
    %941 = vmatprep.subr.mxu0 0.0
    %942 = vmatpush1.msra.mxu0 %v746
    %943 = vmatprep.subr.mxu0 0.0
    %944 = vmatpush1.msra.mxu0 %v743
    %945 = vmatprep.subr.mxu0 0.0
    %946 = vmatpush1.msra.mxu0 %v740
    %947 = vmatprep.subr.mxu0 0.0
    %948 = vmatpush1.msra.mxu0 %v737
    %949 = vmatprep.subr.mxu0 0.0
    %950 = vmatpush1.msra.mxu0 %v734
    %951 = vmatprep.subr.mxu0 0.0
    %952 = vmatpush1.msra.mxu0 %v731
    %953 = vmatprep.subr.mxu0 0.0
    %954 = vmatpush1.msra.mxu0 %v728
    %955 = vmatprep.subr.mxu0 0.0
    %956 = vmatpush1.msra.mxu0 %v725
    %957 = vmatprep.subr.mxu0 0.0
    %958 = vmatpush1.msra.mxu0 %v722
    %959 = vmatprep.subr.mxu0 0.0
    %960 = vmatpush1.msra.mxu0 %v719
    %961 = vmatprep.subr.mxu0 0.0
    %962 = vmatpush1.msra.mxu0 %v716
    %963 = vmatprep.subr.mxu0 0.0
    %964 = vmatpush2.msra.mxu0 %v809
    %965 = vmatprep.subr.mxu0 0.0
    %966 = vmatpush2.msra.mxu0 %v806
    %967 = vmatprep.subr.mxu0 0.0
    %968 = vmatpush2.msra.mxu0 %v803
    %969 = vmatprep.subr.mxu0 0.0
    %970 = vmatpush2.msra.mxu0 %v800
    %971 = vmatprep.subr.mxu0 0.0
    %972 = vmatpush2.msra.mxu0 %v797
    %973 = vmatprep.subr.mxu0 0.0
    %974 = vmatpush2.msra.mxu0 %v794
    %975 = vmatprep.subr.mxu0 0.0
    %976 = vmatpush2.msra.mxu0 %v791
    %977 = vmatprep.subr.mxu0 0.0
    %978 = vmatpush2.msra.mxu0 %v788
    %979 = vmatprep.subr.mxu0 0.0
    %980 = vmatpush2.msra.mxu0 %v785
    %981 = vmatprep.subr.mxu0 0.0
    %982 = vmatpush2.msra.mxu0 %v782
    %983 = vmatprep.subr.mxu0 0.0
    %984 = vmatpush2.msra.mxu0 %v779
    %985 = vmatprep.subr.mxu0 0.0
    %986 = vmatpush2.msra.mxu0 %v776
    %987 = vmatprep.subr.mxu0 0.0
    %988 = vmatpush2.msra.mxu0 %v773
    %989 = vmatprep.subr.mxu0 0.0
    %990 = vmatpush2.msra.mxu0 %v770
    %991 = vmatprep.subr.mxu0 0.0
    %992 = vmatpush2.msra.mxu0 %v767
    %993 = vmatprep.subr.mxu0 0.0
    %994 = vmatpush2.msra.mxu0 %v764
    %995 = vmatprep.mubr.f32.mxu0 %v811
    %996 = vmatmul.mubr.f32.gmra.mxu0 %v810
    %v997 = vpop.f32.mrf.mxu0
    %v998 = vadd.f32 %v825, %v997
    %v999 = vpop.f32.mrf.mxu0
    %1000 = vmatprep.mubr.f32.mxu0 %v813
    %1001 = vmatmul.mubr.f32.gmra.mxu0 %v812
    %v1002 = vpop.f32.mrf.mxu0
    %v1003 = vadd.f32 %v830, %v1002
    %v1004 = vpop.f32.mrf.mxu0
    %1005 = vmatprep.mubr.f32.mxu0 %v815
    %1006 = vmatmul.mubr.f32.gmra.mxu0 %v814
    %v1007 = vpop.f32.mrf.mxu0
    %v1008 = vadd.f32 %v835, %v1007
    %v1009 = vpop.f32.mrf.mxu0
    %1010 = vmatprep.mubr.f32.mxu0 %v817
    %1011 = vmatmul.mubr.f32.gmra.mxu0 %v816
    %v1012 = vpop.f32.mrf.mxu0
    %v1013 = vadd.f32 %v840, %v1012
    %v1014 = vpop.f32.mrf.mxu0
    %1015 = vdwg.mxu0
    %1016 = vst [vmem:[#allocation2] sm:$0xff] %v909
    %1017 = vst [vmem:[#allocation2 + $0x8] sm:$0xff] %v911
    %1018 = vst [vmem:[#allocation2 + $0x10] sm:$0xff] %v998
    %1019 = vst [vmem:[#allocation2 + $0x18] sm:$0xff] %v915
    %1020 = vst [vmem:[#allocation2 + $0x20] sm:$0xff] %v917
    %1021 = vst [vmem:[#allocation2 + $0x28] sm:$0xff] %v1003
    %1022 = vst [vmem:[#allocation2 + $0x30] sm:$0xff] %v921
    %1023 = vst [vmem:[#allocation2 + $0x38] sm:$0xff] %v923
    %1024 = vst [vmem:[#allocation2 + $0x40] sm:$0xff] %v1008
    %1025 = vst [vmem:[#allocation2 + $0x48] sm:$0xff] %v927
    %1026 = vst [vmem:[#allocation2 + $0x50] sm:$0xff] %v929
    %1027 = vst [vmem:[#allocation2 + $0x58] sm:$0xff] %v1013
    // Predicated region
    $region18: #{tpu_custom_call.1} parent=1 // pred_check
      _
    $region19: #{tpu_custom_call.1} parent=1 // pred_check_branch
      %1029 = sbr.rel (0) target = $region21
    $region20: #{tpu_custom_call.1} parent=1 // pred_region
      %s1031 = ssub.s32 1536, 1536
      %1032 = vsyncadd [#allocation3], %s1031
      %s1033 = sshll.u32 [#allocation2], 4
      %s1034 = int_to_ptr.vmem [resolvable:$true] %s1033
      %1039 = dma.vmem_to_hbm [thread:$0]  %s1034, 1536, %s4, [#allocation3], 384, 384, 24
    $region21: #{tpu_custom_call.1} parent=1 // pred_fallthru
      _
    // Predicated region
    $region22: #{tpu_custom_call.1} parent=1 // pred_check
      _
    $region23: #{tpu_custom_call.1} parent=1 // pred_check_branch
      %1041 = sbr.rel (0) target = $region25
    $region24: #{tpu_custom_call.1} parent=1 // pred_region
      %1042 = dma.done [#allocation3], 1536
    $region25: #{tpu_custom_call.1} parent=1 // pred_fallthru
      _
    %1043 = vsyncpa [#allocation3], 1

</llo_original>
